<compile_context>
chip_gen: v6e
topology: v6e:2x2x1
jax: 0.10.0
libtpu: 0.0.40
codegen_flags: <defaults>
</compile_context>

<pallas_src>
import functools
import math

import jax
import jax.numpy as jnp
from jax.experimental import pallas as pl
from jax.experimental.pallas import tpu as pltpu


# ----------------------------------------------------------------------------
# Portable stateless PRNG + dual-branch Box-Muller (pure jnp ops: runs under
# the Pallas interpreter and lowers to plain VPU/EUP work under Mosaic).
# ----------------------------------------------------------------------------
def _mix32(x):
    """murmur3 fmix32 finalizer; works on uint32 scalars and arrays."""
    x = x ^ (x >> 16)
    x = x * jnp.uint32(0x85EBCA6B)
    x = x ^ (x >> 13)
    x = x * jnp.uint32(0xC2B2AE35)
    x = x ^ (x >> 16)
    return x


def _bits_to_unit(bits):
    """uint32 bits -> float32 uniform in [0, 1) using the top 24 bits."""
    return (bits >> 8).astype(jnp.int32).astype(jnp.float32) * jnp.float32(
        1.0 / (1 << 24))


def _hash_normal(block_shape, row_offset, row_width, key1, key2):
    """Standard-normal noise for an (R, C) block.

    Stateless: each element's noise is a pure function of its global flat
    index and the seed-derived keys, so tiles / cores / calls never collide or
    correlate (addresses the seed+program_id collision concern).  Both
    Box-Muller branches (cos and sin) are used when C is even.
    """
    R, C = block_shape
    half = C // 2 if C % 2 == 0 else C
    rows = jax.lax.broadcasted_iota(jnp.int32, (R, half), 0) + row_offset
    cols = jax.lax.broadcasted_iota(jnp.int32, (R, half), 1)
    ctr = rows.astype(jnp.uint32) * jnp.uint32(row_width) + cols.astype(jnp.uint32)
    ctr = ctr * jnp.uint32(0x9E3779B9)              # Weyl spread before mixing
    u1 = 1.0 - _bits_to_unit(_mix32(ctr ^ key1))    # (0, 1] -> log is safe
    u2 = _bits_to_unit(_mix32(ctr ^ key2))          # [0, 1)
    r = jnp.sqrt(-2.0 * jnp.log(u1))
    theta = jnp.float32(2.0 * math.pi) * u2
    z_cos = r * jnp.cos(theta)
    if C % 2 == 0:
        z_sin = r * jnp.sin(theta)
        return jnp.concatenate([z_cos, z_sin], axis=-1)
    return z_cos


# ----------------------------------------------------------------------------
# Kernel
# ----------------------------------------------------------------------------
def vgd_kernel(seed_ref, *refs, truncate, has_mask, use_hw_prng):
    if has_mask:
        x_ref, mask_ref, sigma_ref, o_ref = refs
    else:
        x_ref, sigma_ref, o_ref = refs

    R, W = x_ref.shape

    if use_hw_prng:
        # Mosaic-only fast path (review item #1): hardware PRNG, no Box-Muller
        # transcendentals.  Seeded per (seed, tile) pair.
        pltpu.prng_seed(seed_ref[0], pl.program_id(0))
        eps = pltpu.stateful_normal((R, W), jnp.float32)
    else:
        seed_u = seed_ref[0].astype(jnp.uint32)
        key1 = _mix32(seed_u ^ jnp.uint32(0x1B873593))
        key2 = _mix32(seed_u ^ jnp.uint32(0x68E31DA4))
        row_offset = pl.program_id(0) * R
        eps = _hash_normal((R, W), row_offset, W, key1, key2)

    if truncate is not None:
        # torch.fmod(eps, t): remainder carrying the sign of the dividend.
        # Implemented with the compile-time reciprocal -> no per-element divide.
        t = jnp.float32(truncate)
        inv_t = jnp.float32(1.0 / float(truncate))
        a = jnp.abs(eps)
        rem = a - jnp.floor(a * inv_t) * t
        eps = jnp.where(eps < 0.0, -rem, rem)

    if has_mask:
        eps = eps * mask_ref[...]                 # (R, 1) broadcasts over lanes

    x = x_ref[...].astype(jnp.float32)
    o_ref[...] = (x + sigma_ref[...] * eps).astype(o_ref.dtype)


# ----------------------------------------------------------------------------
# Wrapper
# ----------------------------------------------------------------------------
def variational_gaussian_dropout(x, log_sigma, mask=None, *, truncate=None,
                                 seed=0, block_bytes=2 * 1024 * 1024,
                                 use_hw_prng=False):
    """Forward pass of VariationalGaussianDropout.

    x: (..., H); log_sigma: (H,); mask: shape x.shape[:-1] (or broadcastable)
    or None.  Output has the same shape and dtype as x.
    Set use_hw_prng=True when running exclusively under the Mosaic TPU
    lowering to use the on-chip PRNG instead of the portable hash Box-Muller.
    """
    orig_shape = x.shape
    dtype = x.dtype
    H = orig_shape[-1]
    N = math.prod(orig_shape[:-1]) if len(orig_shape) > 1 else 1
    total = N * H
    has_mask = mask is not None

    # exp(log_sigma) once, in the wrapper (tiny vector).
    sigma = jnp.exp(log_sigma.astype(jnp.float32)).reshape(1, H)

    # Lane-dense folding: with no mask and H | 128, pack 128//H logical rows
    # into one 128-lane row so loads/stores are unmasked full-lane ops.
    fold = 1
    if not has_mask and H < 128 and 128 % H == 0:
        fold = 128 // H
    W = H * fold
    sigma_row = jnp.tile(sigma, (1, fold)) if fold > 1 else sigma   # (1, W)

    rows = pl.cdiv(total, W)

    # Tile sizing: ~block_bytes per input block, rounded to the packed-sublane
    # granularity of the dtype (8 for f32, 16 for bf16, 32 for int8).
    itemsize = jnp.dtype(dtype).itemsize
    m = max(8, 8 * (4 // max(1, itemsize)))
    tgt = max(m, (block_bytes // (W * itemsize)) // m * m)
    rows_m = ((rows + m - 1) // m) * m
    tile_rows = min(tgt, rows_m)
    rows_pad = ((rows + tile_rows - 1) // tile_rows) * tile_rows

    # 2-D working slab in the *native* dtype (no wrapper f32 upcast).
    x_flat = x.reshape(-1)
    pad = rows_pad * W - total
    if pad:
        x_flat = jnp.pad(x_flat, (0, pad))
    x2d = x_flat.reshape(rows_pad, W)

    operands = [x2d]
    in_specs = [pl.BlockSpec((tile_rows, W), lambda i, s: (i, 0))]
    if has_mask:
        mask2d = jnp.broadcast_to(jnp.asarray(mask, jnp.float32),
                                  orig_shape[:-1]).reshape(-1, 1)
        if rows_pad != N:
            mask2d = jnp.pad(mask2d, ((0, rows_pad - N), (0, 0)))
        operands.append(mask2d)
        in_specs.append(pl.BlockSpec((tile_rows, 1), lambda i, s: (i, 0)))
    operands.append(sigma_row)
    in_specs.append(pl.BlockSpec((1, W), lambda i, s: (0, 0)))

    kernel = functools.partial(vgd_kernel, truncate=truncate,
                               has_mask=has_mask, use_hw_prng=use_hw_prng)
    seed_arr = jnp.array([seed], dtype=jnp.int32)

    out2d = pl.pallas_call(
        kernel,
        out_shape=jax.ShapeDtypeStruct((rows_pad, W), dtype),
        grid_spec=pltpu.PrefetchScalarGridSpec(
            num_scalar_prefetch=1,
            grid=(rows_pad // tile_rows,),
            in_specs=in_specs,
            out_specs=pl.BlockSpec((tile_rows, W), lambda i, s: (i, 0)),
        ),
        compiler_params=pltpu.CompilerParams(
            dimension_semantics=("parallel",),       # independent tiles
            vmem_limit_bytes=32 * 1024 * 1024,       # safe on v5e/v6e/v7x
        ),
    )(seed_arr, *operands)

    out_flat = out2d.reshape(-1)
    if pad:
        out_flat = out_flat[:total]
    return out_flat.reshape(orig_shape)


if __name__ == "__main__":
    # Small shapes: batch=2, seq=8, hidden=32 (input_size = 32)
    B, S, H = 2, 8, 32
    key = jax.random.PRNGKey(0)
    kx, km = jax.random.split(key)

    x = jax.random.normal(kx, (B, S, H), dtype=jnp.float32)
    # deterministic parameter init, same as the module: log_sigma filled with -1.0
    log_sigma = jnp.full((H,), -1.0, dtype=jnp.float32)
    # mask with some zero positions (those positions must pass x through unchanged)
    mask = (jax.random.uniform(km, (B, S)) > 0.3).astype(jnp.float32)

    bound = float(jnp.exp(-1.0)) * 2.0 + 1e-5   # exp(log_sigma) * truncate

    # 1) masked call (matches forward(vector, mask) with truncate)
    out = variational_gaussian_dropout(x, log_sigma, mask, truncate=2.0, seed=1234)
    out = jax.block_until_ready(out)
    assert out.shape == x.shape and out.dtype == x.dtype
    zeroed = (mask == 0.0)[..., None]
    assert bool(jnp.all(jnp.where(zeroed, out == x, True)))
    assert bool(jnp.all(jnp.abs(out - x) <= bound))

    # 2) unmasked call (exercises the lane-dense folded layout: H=32 -> W=128)
    out2 = variational_gaussian_dropout(x, log_sigma, mask=None, truncate=2.0, seed=7)
    out2 = jax.block_until_ready(out2)
    assert out2.shape == x.shape and out2.dtype == x.dtype
    assert bool(jnp.all(jnp.abs(out2 - x) <= bound))
    assert bool(jnp.any(out2 != x))              # noise was actually applied

    # 3) bf16 input: output dtype preserved (no wrapper f32 upcast)
    xb = x.astype(jnp.bfloat16)
    out3 = variational_gaussian_dropout(xb, log_sigma, mask=None, truncate=2.0, seed=3)
    out3 = jax.block_until_ready(out3)
    assert out3.shape == xb.shape and out3.dtype == jnp.bfloat16
    assert bool(jnp.all(jnp.isfinite(out3.astype(jnp.float32))))

    print("KERNEL_OK")
</pallas_src>

<mosaic_0001>
module attributes {stable_mosaic.version = 11 : i64} {
  func.func @vgd_kernel(%arg0: i32, %arg1: memref<1xi32, #tpu.memory_space<smem>>, %arg2: memref<16x32xf32, #tpu.memory_space<vmem>>, %arg3: memref<16x1xf32, #tpu.memory_space<vmem>>, %arg4: memref<1x32xf32, #tpu.memory_space<vmem>>, %arg5: memref<16x32xf32, #tpu.memory_space<vmem>>) attributes {dimension_semantics = [#tpu.dimension_semantics<parallel>], iteration_bounds = array<i64: 1>, scalar_prefetch = 1 : i64, scratch_operands = 0 : i64, tpu.core_type = #tpu.core_type<tc>, window_params = [{transform_indices = @transform_0, window_bounds = array<i64: 16, 32>}, {transform_indices = @transform_1, window_bounds = array<i64: 16, 1>}, {pipeline_mode = #tpu.pipeline_mode<synchronous>, transform_indices = @transform_2, window_bounds = array<i64: 1, 32>}, {transform_indices = @transform_3, window_bounds = array<i64: 16, 32>}]} {
    %c0 = arith.constant 0 : index
    %0 = memref.load %arg1[%c0] : memref<1xi32, #tpu.memory_space<smem>>
    %c461845907_i32 = arith.constant 461845907 : i32
    %1 = arith.xori %0, %c461845907_i32 : i32
    %c16_i32 = arith.constant 16 : i32
    %2 = arith.shrui %1, %c16_i32 : i32
    %3 = arith.xori %1, %2 : i32
    %c-2048144789_i32 = arith.constant -2048144789 : i32
    %4 = arith.muli %3, %c-2048144789_i32 : i32
    %c13_i32 = arith.constant 13 : i32
    %5 = arith.shrui %4, %c13_i32 : i32
    %6 = arith.xori %4, %5 : i32
    %c-1028477387_i32 = arith.constant -1028477387 : i32
    %7 = arith.muli %6, %c-1028477387_i32 : i32
    %c16_i32_0 = arith.constant 16 : i32
    %8 = arith.shrui %7, %c16_i32_0 : i32
    %9 = arith.xori %7, %8 : i32
    %c1759714724_i32 = arith.constant 1759714724 : i32
    %10 = arith.xori %0, %c1759714724_i32 : i32
    %c16_i32_1 = arith.constant 16 : i32
    %11 = arith.shrui %10, %c16_i32_1 : i32
    %12 = arith.xori %10, %11 : i32
    %c-2048144789_i32_2 = arith.constant -2048144789 : i32
    %13 = arith.muli %12, %c-2048144789_i32_2 : i32
    %c13_i32_3 = arith.constant 13 : i32
    %14 = arith.shrui %13, %c13_i32_3 : i32
    %15 = arith.xori %13, %14 : i32
    %c-1028477387_i32_4 = arith.constant -1028477387 : i32
    %16 = arith.muli %15, %c-1028477387_i32_4 : i32
    %c16_i32_5 = arith.constant 16 : i32
    %17 = arith.shrui %16, %c16_i32_5 : i32
    %18 = arith.xori %16, %17 : i32
    %c16_i32_6 = arith.constant 16 : i32
    %19 = arith.muli %arg0, %c16_i32_6 : i32
    %20 = tpu.iota {dimensions = array<i32: 0>} : vector<16x16xi32>
    %21 = vector.broadcast %19 : i32 to vector<16x16xi32>
    %22 = arith.addi %20, %21 : vector<16x16xi32>
    %23 = tpu.iota {dimensions = array<i32: 1>} : vector<16x16xi32>
    %c32_i32 = arith.constant 32 : i32
    %24 = vector.broadcast %c32_i32 : i32 to vector<16x16xi32>
    %25 = arith.muli %22, %24 : vector<16x16xi32>
    %26 = arith.addi %25, %23 : vector<16x16xi32>
    %c-1640531527_i32 = arith.constant -1640531527 : i32
    %27 = vector.broadcast %c-1640531527_i32 : i32 to vector<16x16xi32>
    %28 = arith.muli %26, %27 : vector<16x16xi32>
    %29 = vector.broadcast %9 : i32 to vector<16x16xi32>
    %30 = arith.xori %28, %29 : vector<16x16xi32>
    %c16_i32_7 = arith.constant 16 : i32
    %31 = vector.broadcast %c16_i32_7 : i32 to vector<16x16xi32>
    %32 = arith.shrui %30, %31 : vector<16x16xi32>
    %33 = arith.xori %30, %32 : vector<16x16xi32>
    %c-2048144789_i32_8 = arith.constant -2048144789 : i32
    %34 = vector.broadcast %c-2048144789_i32_8 : i32 to vector<16x16xi32>
    %35 = arith.muli %33, %34 : vector<16x16xi32>
    %c13_i32_9 = arith.constant 13 : i32
    %36 = vector.broadcast %c13_i32_9 : i32 to vector<16x16xi32>
    %37 = arith.shrui %35, %36 : vector<16x16xi32>
    %38 = arith.xori %35, %37 : vector<16x16xi32>
    %c-1028477387_i32_10 = arith.constant -1028477387 : i32
    %39 = vector.broadcast %c-1028477387_i32_10 : i32 to vector<16x16xi32>
    %40 = arith.muli %38, %39 : vector<16x16xi32>
    %c16_i32_11 = arith.constant 16 : i32
    %41 = vector.broadcast %c16_i32_11 : i32 to vector<16x16xi32>
    %42 = arith.shrui %40, %41 : vector<16x16xi32>
    %43 = arith.xori %40, %42 : vector<16x16xi32>
    %c8_i32 = arith.constant 8 : i32
    %44 = vector.broadcast %c8_i32 : i32 to vector<16x16xi32>
    %45 = arith.shrui %43, %44 : vector<16x16xi32>
    %46 = arith.sitofp %45 : vector<16x16xi32> to vector<16x16xf32>
    %cst = arith.constant 5.96046448E-8 : f32
    %47 = vector.broadcast %cst : f32 to vector<16x16xf32>
    %48 = arith.mulf %46, %47 : vector<16x16xf32>
    %cst_12 = arith.constant 1.000000e+00 : f32
    %49 = vector.broadcast %cst_12 : f32 to vector<16x16xf32>
    %50 = arith.subf %49, %48 : vector<16x16xf32>
    %51 = vector.broadcast %18 : i32 to vector<16x16xi32>
    %52 = arith.xori %28, %51 : vector<16x16xi32>
    %c16_i32_13 = arith.constant 16 : i32
    %53 = vector.broadcast %c16_i32_13 : i32 to vector<16x16xi32>
    %54 = arith.shrui %52, %53 : vector<16x16xi32>
    %55 = arith.xori %52, %54 : vector<16x16xi32>
    %c-2048144789_i32_14 = arith.constant -2048144789 : i32
    %56 = vector.broadcast %c-2048144789_i32_14 : i32 to vector<16x16xi32>
    %57 = arith.muli %55, %56 : vector<16x16xi32>
    %c13_i32_15 = arith.constant 13 : i32
    %58 = vector.broadcast %c13_i32_15 : i32 to vector<16x16xi32>
    %59 = arith.shrui %57, %58 : vector<16x16xi32>
    %60 = arith.xori %57, %59 : vector<16x16xi32>
    %c-1028477387_i32_16 = arith.constant -1028477387 : i32
    %61 = vector.broadcast %c-1028477387_i32_16 : i32 to vector<16x16xi32>
    %62 = arith.muli %60, %61 : vector<16x16xi32>
    %c16_i32_17 = arith.constant 16 : i32
    %63 = vector.broadcast %c16_i32_17 : i32 to vector<16x16xi32>
    %64 = arith.shrui %62, %63 : vector<16x16xi32>
    %65 = arith.xori %62, %64 : vector<16x16xi32>
    %c8_i32_18 = arith.constant 8 : i32
    %66 = vector.broadcast %c8_i32_18 : i32 to vector<16x16xi32>
    %67 = arith.shrui %65, %66 : vector<16x16xi32>
    %68 = arith.sitofp %67 : vector<16x16xi32> to vector<16x16xf32>
    %cst_19 = arith.constant 5.96046448E-8 : f32
    %69 = vector.broadcast %cst_19 : f32 to vector<16x16xf32>
    %70 = arith.mulf %68, %69 : vector<16x16xf32>
    %71 = math.log %50 : vector<16x16xf32>
    %cst_20 = arith.constant -2.000000e+00 : f32
    %72 = vector.broadcast %cst_20 : f32 to vector<16x16xf32>
    %73 = arith.mulf %72, %71 : vector<16x16xf32>
    %74 = math.sqrt %73 : vector<16x16xf32>
    %cst_21 = arith.constant 6.28318548 : f32
    %75 = vector.broadcast %cst_21 : f32 to vector<16x16xf32>
    %76 = arith.mulf %75, %70 : vector<16x16xf32>
    %77 = math.cos %76 : vector<16x16xf32>
    %78 = arith.mulf %74, %77 : vector<16x16xf32>
    %79 = math.sin %76 : vector<16x16xf32>
    %80 = arith.mulf %74, %79 : vector<16x16xf32>
    %81 = tpu.concatenate %78, %80 in 1 : vector<16x16xf32>, vector<16x16xf32> -> vector<16x32xf32>
    %82 = math.absf %81 : vector<16x32xf32>
    %cst_22 = arith.constant 5.000000e-01 : f32
    %83 = vector.broadcast %cst_22 : f32 to vector<16x32xf32>
    %84 = arith.mulf %82, %83 : vector<16x32xf32>
    %85 = math.floor %84 : vector<16x32xf32>
    %cst_23 = arith.constant 2.000000e+00 : f32
    %86 = vector.broadcast %cst_23 : f32 to vector<16x32xf32>
    %87 = arith.mulf %85, %86 : vector<16x32xf32>
    %88 = arith.subf %82, %87 : vector<16x32xf32>
    %cst_24 = arith.constant 0.000000e+00 : f32
    %89 = vector.broadcast %cst_24 : f32 to vector<16x32xf32>
    %90 = arith.cmpf olt, %81, %89 : vector<16x32xf32>
    %cst_25 = arith.constant 0.000000e+00 : f32
    %91 = vector.broadcast %cst_25 : f32 to vector<16x32xf32>
    %92 = arith.subf %91, %88 : vector<16x32xf32>
    %93 = arith.select %90, %92, %88 : vector<16x32xi1>, vector<16x32xf32>
    %c0_26 = arith.constant 0 : index
    %c0_27 = arith.constant 0 : index
    %94 = vector.load %arg3[%c0_26, %c0_27] : memref<16x1xf32, #tpu.memory_space<vmem>>, vector<16x1xf32>
    %95 = vector.broadcast %94 : vector<16x1xf32> to vector<16x32xf32>
    %96 = arith.mulf %93, %95 : vector<16x32xf32>
    %c0_28 = arith.constant 0 : index
    %c0_29 = arith.constant 0 : index
    %97 = vector.load %arg2[%c0_28, %c0_29] : memref<16x32xf32, #tpu.memory_space<vmem>>, vector<16x32xf32>
    %c0_30 = arith.constant 0 : index
    %c0_31 = arith.constant 0 : index
    %98 = vector.load %arg4[%c0_30, %c0_31] : memref<1x32xf32, #tpu.memory_space<vmem>>, vector<1x32xf32>
    %99 = vector.broadcast %98 : vector<1x32xf32> to vector<16x32xf32>
    %100 = arith.mulf %99, %96 : vector<16x32xf32>
    %101 = arith.addf %97, %100 : vector<16x32xf32>
    %c0_32 = arith.constant 0 : index
    %c0_33 = arith.constant 0 : index
    %102 = vector.load %arg5[%c0_32, %c0_33] : memref<16x32xf32, #tpu.memory_space<vmem>>, vector<16x32xf32>
    tpu.vector_store %arg5[%c0_32, %c0_33], %101 {strides = array<i32>} : memref<16x32xf32, #tpu.memory_space<vmem>>, vector<16x32xf32>,
    return
  }
  func.func @transform_0(%arg0: i32, %arg1: memref<1xi32, #tpu.memory_space<smem>>) -> (i32, i32) {
    %c0_i32 = arith.constant 0 : i32
    %c0_i32_0 = arith.constant 0 : i32
    return %arg0, %c0_i32 : i32, i32
  }
  func.func @transform_1(%arg0: i32, %arg1: memref<1xi32, #tpu.memory_space<smem>>) -> (i32, i32) {
    %c0_i32 = arith.constant 0 : i32
    %c0_i32_0 = arith.constant 0 : i32
    return %arg0, %c0_i32 : i32, i32
  }
  func.func @transform_2(%arg0: i32, %arg1: memref<1xi32, #tpu.memory_space<smem>>) -> (i32, i32) {
    %c0_i32 = arith.constant 0 : i32
    %c0_i32_0 = arith.constant 0 : i32
    %c0_i32_1 = arith.constant 0 : i32
    return %c0_i32, %c0_i32_0 : i32, i32
  }
  func.func @transform_3(%arg0: i32, %arg1: memref<1xi32, #tpu.memory_space<smem>>) -> (i32, i32) {
    %c0_i32 = arith.constant 0 : i32
    %c0_i32_0 = arith.constant 0 : i32
    return %arg0, %c0_i32 : i32, i32
  }
}

</mosaic_0001>

<llo_original>
// kernel: tpu_custom_call.1
$region0: #{tpu_custom_call.1}
  #allocation0 [shape = 'u32[]', space=smem, size = 0x4, offset = 0x4, fixed_abs, tag = 'smem constant byte address 0x4 - core index']
  #allocation1 [shape = 'u32[144,128]{1,0:T(1,128)}', space=vmem, size = 0x12000, scoped, tag = 'internal scratch']
  #allocation2 [shape = 's32[1]{0}', space=sflag, size = 0x4, scoped, tag = 'scoped memory for tpu_custom_call.1']
  #allocation3 [shape = 's32[1]{0:T(128)S(6)}', space=smem, size = 0x200, scoped, tag = 'prefetched SMEM operand 0']
  %s0 = inlined_call_operand.<no memory space> [shape: s32[1], index: 0, kind: input, shape index: {}]
  %s1 = inlined_call_operand.vmem [shape: f32[16,32], index: 1, kind: input, shape index: {}]
  %s2 = inlined_call_operand.vmem [shape: f32[16,1], index: 2, kind: input, shape index: {}]
  %s3 = inlined_call_operand.vmem [shape: f32[1,32], index: 3, kind: input, shape index: {}]
  %s4 = inlined_call_operand.hbm [shape: f32[16,32], index: 4, kind: output, shape index: {}]
  %s5 = sld [smem:[#allocation0]]
  $region22: #{tpu_custom_call.1} parent=0
    _
  %s7 = ssub.s32 1, %s5
  %s8 = scalar_select 0, %s7, %s5
  %9 = sst [smem:[#allocation3]] %s0
  $region1: #{tpu_custom_call.1} parent=0
    #allocation4 [shape = 'u8[8192]{0}', space=vmem, size = 0x2000, scoped, tag = 'output window, operand 0, single buffered']
    #allocation5 [shape = 's32[1]{0}', space=sflag, size = 0x4, scoped, tag = 'scoped memory for tpu_custom_call.1']
    %10 = vsyncpa [#allocation5], 0
    // Predicated region
    $region2: #{tpu_custom_call.1} parent=1 // pred_check
      _
    $region3: #{tpu_custom_call.1} parent=1 // pred_check_branch
      %12 = sbr.rel (0) target = $region5
    $region4: #{tpu_custom_call.1} parent=1 // pred_region
      _
    $region5: #{tpu_custom_call.1} parent=1 // pred_fallthru
      _
    // Predicated region
    $region6: #{tpu_custom_call.1} parent=1 // pred_check
      _
    $region7: #{tpu_custom_call.1} parent=1 // pred_check_branch
      %14 = sbr.rel (0) target = $region9
    $region8: #{tpu_custom_call.1} parent=1 // pred_region
      _
    $region9: #{tpu_custom_call.1} parent=1 // pred_fallthru
      _
    // Predicated region
    $region10: #{tpu_custom_call.1} parent=1 // pred_check
      _
    $region11: #{tpu_custom_call.1} parent=1 // pred_check_branch
      %16 = sbr.rel (0) target = $region13
    $region12: #{tpu_custom_call.1} parent=1 // pred_region
      _
    $region13: #{tpu_custom_call.1} parent=1 // pred_fallthru
      _
    %s17 = sld [smem:[#allocation3]]
    %s18 = sxor.u32 %s17, 461845907
    %s19 = sshrl.u32 %s18, 16
    %s20 = sxor.u32 %s18, %s19
    %s21 = smul.u32 %s20, 2246822507
    %s22 = sshrl.u32 %s21, 13
    %s23 = sxor.u32 %s21, %s22
    %s24 = smul.u32 %s23, 3266489909
    %s25 = sshrl.u32 %s24, 16
    %s26 = sxor.u32 %s24, %s25
    %s27 = sxor.u32 %s17, 1759714724
    %s28 = sshrl.u32 %s27, 16
    %s29 = sxor.u32 %s27, %s28
    %s30 = smul.u32 %s29, 2246822507
    %s31 = sshrl.u32 %s30, 13
    %s32 = sxor.u32 %s30, %s31
    %s33 = smul.u32 %s32, 3266489909
    %s34 = sshrl.u32 %s33, 16
    %s35 = sxor.u32 %s33, %s34
    %s36 = smul.u32 0, 16
    %v37 = vlaneseq
    %v38 = vshrl.u32 %v37, 7
    %v39 = vadd.s32 %v38, 8
    %v40 = vstv %s36
    %v41 = vadd.s32 %v38, %v40
    %v42 = vadd.s32 %v39, %v40
    %v43 = vlaneseq
    %v44 = vand.u32 %v43, 127
    %v45 = vmul.u32 %v41, 32
    %v46 = vmul.u32 %v42, 32
    %v47 = vadd.s32 %v45, %v44
    %v48 = vadd.s32 %v46, %v44
    %v49 = vmul.u32 %v47, 2654435769
    %v50 = vmul.u32 %v48, 2654435769
    %v51 = vstv %s26
    %v52 = vxor.u32 %v49, %v51
    %v53 = vxor.u32 %v50, %v51
    %v54 = vshrl.u32 %v52, 16
    %v55 = vshrl.u32 %v53, 16
    %v56 = vxor.u32 %v52, %v54
    %v57 = vxor.u32 %v53, %v55
    %v58 = vmul.u32 %v56, 2246822507
    %v59 = vmul.u32 %v57, 2246822507
    %v60 = vshrl.u32 %v58, 13
    %v61 = vshrl.u32 %v59, 13
    %v62 = vxor.u32 %v58, %v60
    %v63 = vxor.u32 %v59, %v61
    %v64 = vmul.u32 %v62, 3266489909
    %v65 = vmul.u32 %v63, 3266489909
    %v66 = vshrl.u32 %v64, 16
    %v67 = vshrl.u32 %v65, 16
    %v68 = vxor.u32 %v64, %v66
    %v69 = vxor.u32 %v65, %v67
    %v70 = vshrl.u32 %v68, 8
    %v71 = vshrl.u32 %v69, 8
    %v72 = vcvt.s32.f32 %v70
    %v73 = vcvt.s32.f32 %v71
    %v74 = vmul.f32 %v72, 5.9604645e-08
    %v75 = vmul.f32 %v73, 5.9604645e-08
    %v76 = vsub.f32 1.0, %v74
    %v77 = vsub.f32 1.0, %v75
    %v78 = vstv %s35
    %v79 = vxor.u32 %v49, %v78
    %v80 = vxor.u32 %v50, %v78
    %v81 = vshrl.u32 %v79, 16
    %v82 = vshrl.u32 %v80, 16
    %v83 = vxor.u32 %v79, %v81
    %v84 = vxor.u32 %v80, %v82
    %v85 = vmul.u32 %v83, 2246822507
    %v86 = vmul.u32 %v84, 2246822507
    %v87 = vshrl.u32 %v85, 13
    %v88 = vshrl.u32 %v86, 13
    %v89 = vxor.u32 %v85, %v87
    %v90 = vxor.u32 %v86, %v88
    %v91 = vmul.u32 %v89, 3266489909
    %v92 = vmul.u32 %v90, 3266489909
    %v93 = vshrl.u32 %v91, 16
    %v94 = vshrl.u32 %v92, 16
    %v95 = vxor.u32 %v91, %v93
    %v96 = vxor.u32 %v92, %v94
    %v97 = vshrl.u32 %v95, 8
    %v98 = vshrl.u32 %v96, 8
    %v99 = vcvt.s32.f32 %v97
    %v100 = vcvt.s32.f32 %v98
    %v101 = vmul.f32 %v99, 5.9604645e-08
    %v102 = vmul.f32 %v100, 5.9604645e-08
    %v103 = vlog2.pop %v76
    %v104 = vmul.f32 %v103, 0.6931472
    %v105 = vlog2.pop %v77
    %v106 = vmul.f32 %v105, 0.6931472
    %v107 = vmul.f32 %v104, -2.0
    %v108 = vmul.f32 %v106, -2.0
    %v109 = vrsqrt.pop %v107
    %v110 = vmul.f32 %v107, %v109
    %vm111 = vcmp.eq.f32.partialorder %v107, inf
    %v112 = vsel %vm111, %v107, %v110
    %vm113 = vcmp.eq.f32.partialorder %v107, 0.0
    %v114 = vand.u32 %v107, 2147483648
    %v115 = vsel %vm113, %v114, %v112
    %v116 = vrsqrt.pop %v108
    %v117 = vmul.f32 %v108, %v116
    %vm118 = vcmp.eq.f32.partialorder %v108, inf
    %v119 = vsel %vm118, %v108, %v117
    %vm120 = vcmp.eq.f32.partialorder %v108, 0.0
    %v121 = vand.u32 %v108, 2147483648
    %v122 = vsel %vm120, %v121, %v119
    %v123 = vmul.f32 %v101, 6.2831855
    %v124 = vmul.f32 %v102, 6.2831855
    %v125 = vand.u32 2147483647, %v123
    %vm126 = vcmp.le.f32.partialorder %v125, 0.7853982
    %vm127 = vcmp.lt.s32.totalorder %v123, 0
    %v128 = vand.u32 %v123, 2139095040
    %v129 = vshrl.u32 %v128, 23
    %v130 = vsub.s32 %v129, 127
    %v131 = vand.u32 2147483647, %v123
    %v132 = vand.u32 %v131, 8388607
    %v133 = vor.u32 %v132, 8388608
    %v134 = vsub.s32 0, %v133
    %v135 = vadd.s32 %v130, 1
    %vm136 = vcmp.gt.s32.totalorder %v135, 0
    %v137 = vsel %vm136, %v135, 0
    %v138 = vshrl.u32 %v137, 5
    %v139 = vand.u32 %v137, 31
    %v140 = vsub.s32 32, %v139
    %v141 = vshrl.u32 683565275, %v140
    %v142 = vshll.u32 683565275, %v139
    %v143 = vshrl.u32 2475754826, %v140
    %v144 = vor.u32 %v142, %v143
    %v145 = vshll.u32 2475754826, %v139
    %v146 = vshrl.u32 2131351028, %v140
    %v147 = vor.u32 %v145, %v146
    %v148 = vshll.u32 2131351028, %v139
    %v149 = vshrl.u32 2102212464, %v140
    %v150 = vor.u32 %v148, %v149
    %v151 = vshll.u32 2102212464, %v139
    %v152 = vshrl.u32 920167782, %v140
    %v153 = vor.u32 %v151, %v152
    %v154 = vshll.u32 920167782, %v139
    %v155 = vshrl.u32 1326507024, %v140
    %v156 = vor.u32 %v154, %v155
    %vm157 = vcmp.lt.s32.totalorder %v138, 1
    %vm158 = vcmp.lt.s32.totalorder %v138, 2
    %vm159 = vcmp.lt.s32.totalorder %v138, 3
    %vm160 = vcmp.lt.s32.totalorder %v138, 4
    %v161 = vsel %vm157, %v141, %v144
    %v162 = vsel %vm160, %v150, 2102212464
    %v163 = vsel %vm159, %v147, %v162
    %v164 = vsel %vm158, %v161, %v163
    %v165 = vsel %vm157, %v144, %v147
    %v166 = vsel %vm160, %v153, 920167782
    %v167 = vsel %vm159, %v150, %v166
    %v168 = vsel %vm158, %v165, %v167
    %v169 = vsel %vm157, %v147, %v150
    %v170 = vsel %vm160, %v156, 1326507024
    %v171 = vsel %vm159, %v153, %v170
    %v172 = vsel %vm158, %v169, %v171
    %v173 = vshll.u32 %v133, 8
    %v174 = vmul.u32.u64.compose %v173, %v172
    %v175 = vextract.low.u32 %v174
    %v176 = vextract.high.u32 %v174
    %v177 = vmul.u32.u64.compose %v173, %v168
    %v178 = vextract.low.u32 %v177
    %v179 = vextract.high.u32 %v177
    %v180 = vmul.u32 %v173, %v164
    %v181 = vadd.s32 %v176, %v178
    %vm182 = vc.u32 %v176, %v178
    %v183 = vadd.s32 %v179, 1
    %v184 = vsel %vm182, %v183, %v179
    %v185 = vadd.s32 %v180, %v184
    %v186 = vadd.s32 %v185, 536870912
    %v187 = vshrl.u32 %v186, 30
    %v188 = vshll.u32 %v187, 30
    %v189 = vsub.s32 %v185, %v188
    %vm190 = vcmp.lt.s32.totalorder %v189, 0
    %v191 = vsub.s32 0, %v189
    %v192 = vsel %vm190, %v191, %v189
    %v193 = vclz %v192
    %v194 = vsub.s32 %v193, 2
    %vm195 = vcmp.gt.s32.totalorder 0, %v194
    %v196 = vsel %vm195, 0, %v194
    %v197 = vsub.s32 32, %v196
    %v198 = vshll.u32 %v189, %v196
    %v199 = vshrl.u32 %v181, %v197
    %v200 = vor.u32 %v198, %v199
    %v201 = vsub.s32 4294967266, %v196
    %v202 = vadd.s32 %v201, 127
    %v203 = vshll.u32 %v202, 23
    %v204 = vor.u32 4788187, %v203
    %v205 = vand.u32 2147483647, %v204
    %v207 = vcvt.s32.f32 %v200
    %v208 = vmul.f32 %v207, %v205
    %v209 = vxor.u32 %v208, 2147483648
    %v210 = vsel %vm127, %v209, %v208
    %v211 = vsub.s32 4, %v187
    %v212 = vsel %vm127, %v211, %v187
    %v213 = vsel %vm126, %v123, %v210
    %v214 = vsel %vm126, 0, %v212
    %v215 = vcosq.f32.pop %v213
    %v216 = vsinq.f32.pop %v213
    %vm217 = vweird.f32 %v123
    %v218 = vand.u32 %v214, 3
    %vm219 = vcmp.lt.s32.totalorder %v218, 2
    %vm220 = vcmp.eq.s32.totalorder %v218, 0
    %v221 = vxor.u32 %v216, 2147483648
    %v222 = vsel %vm220, %v215, %v221
    %vm223 = vcmp.eq.s32.totalorder %v218, 2
    %v224 = vxor.u32 %v215, 2147483648
    %v225 = vsel %vm223, %v224, %v216
    %v226 = vsel %vm219, %v222, %v225
    %v227 = vsel %vm217, nan, %v226
    %v228 = vand.u32 2147483647, %v124
    %vm229 = vcmp.le.f32.partialorder %v228, 0.7853982
    %vm230 = vcmp.lt.s32.totalorder %v124, 0
    %v231 = vand.u32 %v124, 2139095040
    %v232 = vshrl.u32 %v231, 23
    %v233 = vsub.s32 %v232, 127
    %v234 = vand.u32 2147483647, %v124
    %v235 = vand.u32 %v234, 8388607
    %v236 = vor.u32 %v235, 8388608
    %v237 = vsub.s32 0, %v236
    %v238 = vadd.s32 %v233, 1
    %vm239 = vcmp.gt.s32.totalorder %v238, 0
    %v240 = vsel %vm239, %v238, 0
    %v241 = vshrl.u32 %v240, 5
    %v242 = vand.u32 %v240, 31
    %v243 = vsub.s32 32, %v242
    %v244 = vshrl.u32 683565275, %v243
    %v245 = vshll.u32 683565275, %v242
    %v246 = vshrl.u32 2475754826, %v243
    %v247 = vor.u32 %v245, %v246
    %v248 = vshll.u32 2475754826, %v242
    %v249 = vshrl.u32 2131351028, %v243
    %v250 = vor.u32 %v248, %v249
    %v251 = vshll.u32 2131351028, %v242
    %v252 = vshrl.u32 2102212464, %v243
    %v253 = vor.u32 %v251, %v252
    %v254 = vshll.u32 2102212464, %v242
    %v255 = vshrl.u32 920167782, %v243
    %v256 = vor.u32 %v254, %v255
    %v257 = vshll.u32 920167782, %v242
    %v258 = vshrl.u32 1326507024, %v243
    %v259 = vor.u32 %v257, %v258
    %vm260 = vcmp.lt.s32.totalorder %v241, 1
    %vm261 = vcmp.lt.s32.totalorder %v241, 2
    %vm262 = vcmp.lt.s32.totalorder %v241, 3
    %vm263 = vcmp.lt.s32.totalorder %v241, 4
    %v264 = vsel %vm260, %v244, %v247
    %v265 = vsel %vm263, %v253, 2102212464
    %v266 = vsel %vm262, %v250, %v265
    %v267 = vsel %vm261, %v264, %v266
    %v268 = vsel %vm260, %v247, %v250
    %v269 = vsel %vm263, %v256, 920167782
    %v270 = vsel %vm262, %v253, %v269
    %v271 = vsel %vm261, %v268, %v270
    %v272 = vsel %vm260, %v250, %v253
    %v273 = vsel %vm263, %v259, 1326507024
    %v274 = vsel %vm262, %v256, %v273
    %v275 = vsel %vm261, %v272, %v274
    %v276 = vshll.u32 %v236, 8
    %v277 = vmul.u32.u64.compose %v276, %v275
    %v278 = vextract.low.u32 %v277
    %v279 = vextract.high.u32 %v277
    %v280 = vmul.u32.u64.compose %v276, %v271
    %v281 = vextract.low.u32 %v280
    %v282 = vextract.high.u32 %v280
    %v283 = vmul.u32 %v276, %v267
    %v284 = vadd.s32 %v279, %v281
    %vm285 = vc.u32 %v279, %v281
    %v286 = vadd.s32 %v282, 1
    %v287 = vsel %vm285, %v286, %v282
    %v288 = vadd.s32 %v283, %v287
    %v289 = vadd.s32 %v288, 536870912
    %v290 = vshrl.u32 %v289, 30
    %v291 = vshll.u32 %v290, 30
    %v292 = vsub.s32 %v288, %v291
    %vm293 = vcmp.lt.s32.totalorder %v292, 0
    %v294 = vsub.s32 0, %v292
    %v295 = vsel %vm293, %v294, %v292
    %v296 = vclz %v295
    %v297 = vsub.s32 %v296, 2
    %vm298 = vcmp.gt.s32.totalorder 0, %v297
    %v299 = vsel %vm298, 0, %v297
    %v300 = vsub.s32 32, %v299
    %v301 = vshll.u32 %v292, %v299
    %v302 = vshrl.u32 %v284, %v300
    %v303 = vor.u32 %v301, %v302
    %v304 = vsub.s32 4294967266, %v299
    %v305 = vadd.s32 %v304, 127
    %v306 = vshll.u32 %v305, 23
    %v307 = vor.u32 4788187, %v306
    %v308 = vand.u32 2147483647, %v307
    %v310 = vcvt.s32.f32 %v303
    %v311 = vmul.f32 %v310, %v308
    %v312 = vxor.u32 %v311, 2147483648
    %v313 = vsel %vm230, %v312, %v311
    %v314 = vsub.s32 4, %v290
    %v315 = vsel %vm230, %v314, %v290
    %v316 = vsel %vm229, %v124, %v313
    %v317 = vsel %vm229, 0, %v315
    %v318 = vcosq.f32.pop %v316
    %v319 = vsinq.f32.pop %v316
    %vm320 = vweird.f32 %v124
    %v321 = vand.u32 %v317, 3
    %vm322 = vcmp.lt.s32.totalorder %v321, 2
    %vm323 = vcmp.eq.s32.totalorder %v321, 0
    %v324 = vxor.u32 %v319, 2147483648
    %v325 = vsel %vm323, %v318, %v324
    %vm326 = vcmp.eq.s32.totalorder %v321, 2
    %v327 = vxor.u32 %v318, 2147483648
    %v328 = vsel %vm326, %v327, %v319
    %v329 = vsel %vm322, %v325, %v328
    %v330 = vsel %vm320, nan, %v329
    %v331 = vmul.f32 %v115, %v227
    %v332 = vmul.f32 %v122, %v330
    %v333 = vand.u32 2147483647, %v123
    %vm334 = vcmp.le.f32.partialorder %v333, 0.7853982
    %vm335 = vcmp.lt.s32.totalorder %v123, 0
    %v336 = vand.u32 %v123, 2139095040
    %v337 = vshrl.u32 %v336, 23
    %v338 = vsub.s32 %v337, 127
    %v339 = vand.u32 2147483647, %v123
    %v340 = vand.u32 %v339, 8388607
    %v341 = vor.u32 %v340, 8388608
    %v342 = vsub.s32 0, %v341
    %v343 = vadd.s32 %v338, 1
    %vm344 = vcmp.gt.s32.totalorder %v343, 0
    %v345 = vsel %vm344, %v343, 0
    %v346 = vshrl.u32 %v345, 5
    %v347 = vand.u32 %v345, 31
    %v348 = vsub.s32 32, %v347
    %v349 = vshrl.u32 683565275, %v348
    %v350 = vshll.u32 683565275, %v347
    %v351 = vshrl.u32 2475754826, %v348
    %v352 = vor.u32 %v350, %v351
    %v353 = vshll.u32 2475754826, %v347
    %v354 = vshrl.u32 2131351028, %v348
    %v355 = vor.u32 %v353, %v354
    %v356 = vshll.u32 2131351028, %v347
    %v357 = vshrl.u32 2102212464, %v348
    %v358 = vor.u32 %v356, %v357
    %v359 = vshll.u32 2102212464, %v347
    %v360 = vshrl.u32 920167782, %v348
    %v361 = vor.u32 %v359, %v360
    %v362 = vshll.u32 920167782, %v347
    %v363 = vshrl.u32 1326507024, %v348
    %v364 = vor.u32 %v362, %v363
    %vm365 = vcmp.lt.s32.totalorder %v346, 1
    %vm366 = vcmp.lt.s32.totalorder %v346, 2
    %vm367 = vcmp.lt.s32.totalorder %v346, 3
    %vm368 = vcmp.lt.s32.totalorder %v346, 4
    %v369 = vsel %vm365, %v349, %v352
    %v370 = vsel %vm368, %v358, 2102212464
    %v371 = vsel %vm367, %v355, %v370
    %v372 = vsel %vm366, %v369, %v371
    %v373 = vsel %vm365, %v352, %v355
    %v374 = vsel %vm368, %v361, 920167782
    %v375 = vsel %vm367, %v358, %v374
    %v376 = vsel %vm366, %v373, %v375
    %v377 = vsel %vm365, %v355, %v358
    %v378 = vsel %vm368, %v364, 1326507024
    %v379 = vsel %vm367, %v361, %v378
    %v380 = vsel %vm366, %v377, %v379
    %v381 = vshll.u32 %v341, 8
    %v382 = vmul.u32.u64.compose %v381, %v380
    %v383 = vextract.low.u32 %v382
    %v384 = vextract.high.u32 %v382
    %v385 = vmul.u32.u64.compose %v381, %v376
    %v386 = vextract.low.u32 %v385
    %v387 = vextract.high.u32 %v385
    %v388 = vmul.u32 %v381, %v372
    %v389 = vadd.s32 %v384, %v386
    %vm390 = vc.u32 %v384, %v386
    %v391 = vadd.s32 %v387, 1
    %v392 = vsel %vm390, %v391, %v387
    %v393 = vadd.s32 %v388, %v392
    %v394 = vadd.s32 %v393, 536870912
    %v395 = vshrl.u32 %v394, 30
    %v396 = vshll.u32 %v395, 30
    %v397 = vsub.s32 %v393, %v396
    %vm398 = vcmp.lt.s32.totalorder %v397, 0
    %v399 = vsub.s32 0, %v397
    %v400 = vsel %vm398, %v399, %v397
    %v401 = vclz %v400
    %v402 = vsub.s32 %v401, 2
    %vm403 = vcmp.gt.s32.totalorder 0, %v402
    %v404 = vsel %vm403, 0, %v402
    %v405 = vsub.s32 32, %v404
    %v406 = vshll.u32 %v397, %v404
    %v407 = vshrl.u32 %v389, %v405
    %v408 = vor.u32 %v406, %v407
    %v409 = vsub.s32 4294967266, %v404
    %v410 = vadd.s32 %v409, 127
    %v411 = vshll.u32 %v410, 23
    %v412 = vor.u32 4788187, %v411
    %v413 = vand.u32 2147483647, %v412
    %v415 = vcvt.s32.f32 %v408
    %v416 = vmul.f32 %v415, %v413
    %v417 = vxor.u32 %v416, 2147483648
    %v418 = vsel %vm335, %v417, %v416
    %v419 = vsub.s32 4, %v395
    %v420 = vsel %vm335, %v419, %v395
    %v421 = vsel %vm334, %v123, %v418
    %v422 = vsel %vm334, 0, %v420
    %v423 = vcosq.f32.pop %v421
    %v424 = vsinq.f32.pop %v421
    %vm425 = vweird.f32 %v123
    %v426 = vadd.s32 %v422, 3
    %v427 = vand.u32 %v426, 3
    %vm428 = vcmp.lt.s32.totalorder %v427, 2
    %vm429 = vcmp.eq.s32.totalorder %v427, 0
    %v430 = vxor.u32 %v424, 2147483648
    %v431 = vsel %vm429, %v423, %v430
    %vm432 = vcmp.eq.s32.totalorder %v427, 2
    %v433 = vxor.u32 %v423, 2147483648
    %v434 = vsel %vm432, %v433, %v424
    %v435 = vsel %vm428, %v431, %v434
    %v436 = vsel %vm425, nan, %v435
    %v437 = vand.u32 2147483647, %v124
    %vm438 = vcmp.le.f32.partialorder %v437, 0.7853982
    %vm439 = vcmp.lt.s32.totalorder %v124, 0
    %v440 = vand.u32 %v124, 2139095040
    %v441 = vshrl.u32 %v440, 23
    %v442 = vsub.s32 %v441, 127
    %v443 = vand.u32 2147483647, %v124
    %v444 = vand.u32 %v443, 8388607
    %v445 = vor.u32 %v444, 8388608
    %v446 = vsub.s32 0, %v445
    %v447 = vadd.s32 %v442, 1
    %vm448 = vcmp.gt.s32.totalorder %v447, 0
    %v449 = vsel %vm448, %v447, 0
    %v450 = vshrl.u32 %v449, 5
    %v451 = vand.u32 %v449, 31
    %v452 = vsub.s32 32, %v451
    %v453 = vshrl.u32 683565275, %v452
    %v454 = vshll.u32 683565275, %v451
    %v455 = vshrl.u32 2475754826, %v452
    %v456 = vor.u32 %v454, %v455
    %v457 = vshll.u32 2475754826, %v451
    %v458 = vshrl.u32 2131351028, %v452
    %v459 = vor.u32 %v457, %v458
    %v460 = vshll.u32 2131351028, %v451
    %v461 = vshrl.u32 2102212464, %v452
    %v462 = vor.u32 %v460, %v461
    %v463 = vshll.u32 2102212464, %v451
    %v464 = vshrl.u32 920167782, %v452
    %v465 = vor.u32 %v463, %v464
    %v466 = vshll.u32 920167782, %v451
    %v467 = vshrl.u32 1326507024, %v452
    %v468 = vor.u32 %v466, %v467
    %vm469 = vcmp.lt.s32.totalorder %v450, 1
    %vm470 = vcmp.lt.s32.totalorder %v450, 2
    %vm471 = vcmp.lt.s32.totalorder %v450, 3
    %vm472 = vcmp.lt.s32.totalorder %v450, 4
    %v473 = vsel %vm469, %v453, %v456
    %v474 = vsel %vm472, %v462, 2102212464
    %v475 = vsel %vm471, %v459, %v474
    %v476 = vsel %vm470, %v473, %v475
    %v477 = vsel %vm469, %v456, %v459
    %v478 = vsel %vm472, %v465, 920167782
    %v479 = vsel %vm471, %v462, %v478
    %v480 = vsel %vm470, %v477, %v479
    %v481 = vsel %vm469, %v459, %v462
    %v482 = vsel %vm472, %v468, 1326507024
    %v483 = vsel %vm471, %v465, %v482
    %v484 = vsel %vm470, %v481, %v483
    %v485 = vshll.u32 %v445, 8
    %v486 = vmul.u32.u64.compose %v485, %v484
    %v487 = vextract.low.u32 %v486
    %v488 = vextract.high.u32 %v486
    %v489 = vmul.u32.u64.compose %v485, %v480
    %v490 = vextract.low.u32 %v489
    %v491 = vextract.high.u32 %v489
    %v492 = vmul.u32 %v485, %v476
    %v493 = vadd.s32 %v488, %v490
    %vm494 = vc.u32 %v488, %v490
    %v495 = vadd.s32 %v491, 1
    %v496 = vsel %vm494, %v495, %v491
    %v497 = vadd.s32 %v492, %v496
    %v498 = vadd.s32 %v497, 536870912
    %v499 = vshrl.u32 %v498, 30
    %v500 = vshll.u32 %v499, 30
    %v501 = vsub.s32 %v497, %v500
    %vm502 = vcmp.lt.s32.totalorder %v501, 0
    %v503 = vsub.s32 0, %v501
    %v504 = vsel %vm502, %v503, %v501
    %v505 = vclz %v504
    %v506 = vsub.s32 %v505, 2
    %vm507 = vcmp.gt.s32.totalorder 0, %v506
    %v508 = vsel %vm507, 0, %v506
    %v509 = vsub.s32 32, %v508
    %v510 = vshll.u32 %v501, %v508
    %v511 = vshrl.u32 %v493, %v509
    %v512 = vor.u32 %v510, %v511
    %v513 = vsub.s32 4294967266, %v508
    %v514 = vadd.s32 %v513, 127
    %v515 = vshll.u32 %v514, 23
    %v516 = vor.u32 4788187, %v515
    %v517 = vand.u32 2147483647, %v516
    %v519 = vcvt.s32.f32 %v512
    %v520 = vmul.f32 %v519, %v517
    %v521 = vxor.u32 %v520, 2147483648
    %v522 = vsel %vm439, %v521, %v520
    %v523 = vsub.s32 4, %v499
    %v524 = vsel %vm439, %v523, %v499
    %v525 = vsel %vm438, %v124, %v522
    %v526 = vsel %vm438, 0, %v524
    %v527 = vcosq.f32.pop %v525
    %v528 = vsinq.f32.pop %v525
    %vm529 = vweird.f32 %v124
    %v530 = vadd.s32 %v526, 3
    %v531 = vand.u32 %v530, 3
    %vm532 = vcmp.lt.s32.totalorder %v531, 2
    %vm533 = vcmp.eq.s32.totalorder %v531, 0
    %v534 = vxor.u32 %v528, 2147483648
    %v535 = vsel %vm533, %v527, %v534
    %vm536 = vcmp.eq.s32.totalorder %v531, 2
    %v537 = vxor.u32 %v527, 2147483648
    %v538 = vsel %vm536, %v537, %v528
    %v539 = vsel %vm532, %v535, %v538
    %v540 = vsel %vm529, nan, %v539
    %v541 = vmul.f32 %v115, %v436
    %v542 = vmul.f32 %v122, %v540
    %545 = vrot.lane.b32.xlu0 %v541, 16
    %v546 = vpop.permute.xlu0 %545
    %547 = vrot.lane.b32.xlu0 %v542, 16
    %v548 = vpop.permute.xlu0 %547
    %vm551 = vcmask 130048
    %v552 = vsel %vm551, %v331, %v546
    %v553 = vsel %vm551, %v332, %v548
    %v554 = vand.u32 2147483647, %v552
    %v555 = vand.u32 2147483647, %v553
    %v556 = vmul.f32 %v554, 0.5
    %v557 = vmul.f32 %v555, 0.5
    %v558 = vfloor.f32 %v556
    %v559 = vfloor.f32 %v557
    %v560 = vmul.f32 %v558, 2.0
    %v561 = vmul.f32 %v559, 2.0
    %v562 = vsub.f32 %v554, %v560
    %v563 = vsub.f32 %v555, %v561
    %vm564 = vcmp.lt.f32.partialorder %v552, 0.0
    %vm565 = vcmp.lt.f32.partialorder %v553, 0.0
    %v566 = vsub.f32 0.0, %v562
    %v567 = vsub.f32 0.0, %v563
    %v568 = vsel %vm564, %v566, %v562
    %v569 = vsel %vm565, %v567, %v563
    %v570 = vld [vmem:[%s2] sm:$0xff]
    %v571 = vld [vmem:[%s2 + $0x8] sm:$0xff]
    %573 = vset.pattern.permute.xlu0 0
    %574 = vperm.xlu0 %573, %v570
    %v575 = vpop.permute.xlu0 %574
    %578 = vset.pattern.permute.xlu0 0
    %579 = vperm.xlu0 %578, %v571
    %v580 = vpop.permute.xlu0 %579
    %v582 = vmul.f32 %v568, %v575
    %v583 = vmul.f32 %v569, %v580
    %v584 = vld [vmem:[%s1] sm:$0xff]
    %v585 = vld [vmem:[%s1 + $0x8] sm:$0xff]
    %v586 = vld [vmem:[%s3] sm:$0x1]
    %v588 = vlaneseq
    %v589 = vshrl.u32 %v588, 7
    %v590 = vsub.s32 0, %v589
    %v591 = vrot.slane %v586, %v590
    %v593 = vmul.f32 %v591, %v582
    %v594 = vmul.f32 %v591, %v583
    %v595 = vadd.f32 %v584, %v593
    %v596 = vadd.f32 %v585, %v594
    %vm597 = vcmask 261120
    %598 = vst.msk [vmem:[#allocation4] sm:$0xff] %vm597, %v595
    %599 = vst.msk [vmem:[#allocation4 + $0x8] sm:$0xff] %vm597, %v596
    // Predicated region
    $region14: #{tpu_custom_call.1} parent=1 // pred_check
      _
    $region15: #{tpu_custom_call.1} parent=1 // pred_check_branch
      %601 = sbr.rel (0) target = $region17
    $region16: #{tpu_custom_call.1} parent=1 // pred_region
      %s603 = ssub.s32 256, 256
      %604 = vsyncadd [#allocation5], %s603
      %s605 = sshll.u32 [#allocation4], 4
      %s606 = int_to_ptr.vmem [resolvable:$true] %s605
      %611 = dma.vmem_to_hbm [thread:$0]  %s606, 256, %s4, [#allocation5], 128, 128, 8
    $region17: #{tpu_custom_call.1} parent=1 // pred_fallthru
      _
    // Predicated region
    $region18: #{tpu_custom_call.1} parent=1 // pred_check
      _
    $region19: #{tpu_custom_call.1} parent=1 // pred_check_branch
      %613 = sbr.rel (0) target = $region21
    $region20: #{tpu_custom_call.1} parent=1 // pred_region
      %614 = dma.done [#allocation5], 256
    $region21: #{tpu_custom_call.1} parent=1 // pred_fallthru
      _
    %615 = vsyncpa [#allocation5], 1

</llo_original>
